<compile_context>
chip_gen: v7x
topology: tpu7x:2x2x1
jax: 0.10.0
libtpu: 0.0.40
codegen_flags: <defaults>
</compile_context>

<pallas_src>
import jax
import jax.numpy as jnp
from jax.experimental import pallas as pl
from jax.experimental.pallas import tpu as pltpu

_LANES = (512, 384, 256, 128)        # candidate lane-dense widths (x128)
_MAX_BLOCK_ELEMS = 512 * 512         # ~1 MiB f32 per input block
_EPS = 1e-4


def _round_up(x, m):
    return (x + m - 1) // m * m


def _cdiv(a, b):
    return (a + b - 1) // b


def _make_kernel(tile_rows, lane, valid_rows_last):
    """Builds the kernel with the static tile config baked in."""
    ragged = valid_rows_last != tile_rows  # only the last block can overrun

    def kernel(o_ref, m_ref, t_ref, num_ref, den_ref):
        i = pl.program_id(0)
        last = pl.num_programs(0) - 1

        @pl.when(i == 0)
        def _init():
            num_ref[...] = jnp.zeros_like(num_ref)
            den_ref[...] = jnp.zeros_like(den_ref)

        o = o_ref[...].astype(jnp.float32)
        m = m_ref[...].astype(jnp.float32)
        t = t_ref[...].astype(jnp.float32)

        # Fused masked L1 (one fewer vmul than |o*m - t*m|; differs from the
        # reference by a single f32 rounding).
        val = jnp.abs((o - t) * m)
        den = m

        if ragged:
            # Mask rows that lie past the end of the array in the (only
            # possibly ragged) last block.  Select, not multiply, so garbage
            # (even NaN/Inf) in the out-of-bounds rows cannot propagate.
            limit = jnp.where(i == last, valid_rows_last, tile_rows)
            row_id = jax.lax.broadcasted_iota(jnp.int32, (tile_rows, lane), 0)
            keep = row_id < limit
            val = jnp.where(keep, val, 0.0)
            den = jnp.where(keep, den, 0.0)

        # Per-step reduce (tile_rows, lane) -> (8, lane): layout-preserving
        # reshape + VPU adds, accumulated straight into the resident output
        # block (constant out-block index across the "arbitrary" axis).
        num_ref[...] += jnp.sum(val.reshape(tile_rows // 8, 8, lane), axis=0)
        den_ref[...] += jnp.sum(den.reshape(tile_rows // 8, 8, lane), axis=0)

    return kernel


def sparse_reg_weighted_l1_loss(output, mask, target):
    assert output.shape == mask.shape == target.shape
    total = int(output.size)
    if total == 0:
        return jnp.float32(0.0)

    # Widest lane width that divides the flattened size (and leaves >= 8 full
    # rows) -> pad-free fast path with zero extra HBM traffic in the wrapper.
    lane = next((l for l in _LANES if total % l == 0 and total // l >= 8), None)

    flat_o = output.reshape(-1)
    flat_m = mask.reshape(-1)
    flat_t = target.reshape(-1)

    if lane is None:
        # Rare slow path (tiny input, or size not a multiple of 128): minimal
        # zero pad to a whole number of 8-row tiles.  Zero padding contributes
        # 0 to both the numerator and the mask-sum.
        lane = _LANES[0]
        rows = max(8, _round_up(_cdiv(total, lane), 8))
        pad = rows * lane - total
        flat_o = jnp.pad(flat_o, (0, pad))
        flat_m = jnp.pad(flat_m, (0, pad))
        flat_t = jnp.pad(flat_t, (0, pad))
    else:
        rows = total // lane

    o2 = flat_o.reshape(rows, lane)
    m2 = flat_m.reshape(rows, lane)
    t2 = flat_t.reshape(rows, lane)

    # Adaptive tile height: keep blocks near 1 MiB, rows a multiple of 8, and
    # never larger than the array (so only the final block can be ragged).
    max_tile_rows = max(8, _MAX_BLOCK_ELEMS // lane)
    steps_target = _cdiv(rows, max_tile_rows)
    tile_rows = _round_up(_cdiv(rows, steps_target), 8)
    tile_rows = max(8, min(tile_rows, (rows // 8) * 8))
    steps = _cdiv(rows, tile_rows)
    valid_rows_last = rows - (steps - 1) * tile_rows

    kernel = _make_kernel(tile_rows, lane, valid_rows_last)

    in_spec = pl.BlockSpec((tile_rows, lane), lambda i: (i, 0))
    out_spec = pl.BlockSpec((8, lane), lambda i: (0, 0))

    num_p, den_p = pl.pallas_call(
        kernel,
        out_shape=(
            jax.ShapeDtypeStruct((8, lane), jnp.float32),
            jax.ShapeDtypeStruct((8, lane), jnp.float32),
        ),
        grid=(steps,),
        in_specs=[in_spec, in_spec, in_spec],
        out_specs=(out_spec, out_spec),
        compiler_params=pltpu.CompilerParams(
            dimension_semantics=("arbitrary",),
            vmem_limit_bytes=32 * 1024 * 1024,
        ),
    )(o2, m2, t2)

    num = jnp.sum(num_p)
    den = jnp.sum(den_p)
    return num / (den + jnp.float32(_EPS))


def _reference(output, mask, target):
    num = jnp.sum(jnp.abs(output * mask - target * mask))
    return num / (jnp.sum(mask) + 0.0001)


def _check(shape, key):
    k1, k2, k3 = jax.random.split(key, 3)
    output = jax.random.normal(k1, shape, dtype=jnp.float32)
    target = jax.random.normal(k2, shape, dtype=jnp.float32)
    mask = (jax.random.uniform(k3, shape) > 0.5).astype(jnp.float32)

    loss = jax.block_until_ready(sparse_reg_weighted_l1_loss(output, mask, target))
    ref = jax.block_until_ready(_reference(output, mask, target))
    assert jnp.allclose(loss, ref, rtol=1e-4, atol=1e-6), (shape, loss, ref)


if __name__ == "__main__":
    key = jax.random.PRNGKey(0)
    ks = jax.random.split(key, 4)

    # Module-scale shape (tiny: minimal-pad fallback, single 8x512 tile).
    _check((2, 8, 32), ks[0])
    # Pad-free multi-step path with a ragged last block (600 rows, tile 304).
    _check((3, 200, 512), ks[1])
    # Pad-free path where the flat size divides 512 but not the tile (1285 rows).
    _check((8, 257, 320), ks[2])
    # Size not divisible by 128: minimal-pad fallback path.
    _check((5, 7, 13), ks[3])

    print("KERNEL_OK")
</pallas_src>

<mosaic_0001>
module attributes {stable_mosaic.version = 11 : i64} {
  func.func @kernel(%arg0: i32, %arg1: memref<8x512xf32, #tpu.memory_space<vmem>>, %arg2: memref<8x512xf32, #tpu.memory_space<vmem>>, %arg3: memref<8x512xf32, #tpu.memory_space<vmem>>, %arg4: memref<8x512xf32, #tpu.memory_space<vmem>>, %arg5: memref<8x512xf32, #tpu.memory_space<vmem>>) attributes {dimension_semantics = [#tpu.dimension_semantics<arbitrary>], iteration_bounds = array<i64: 1>, scalar_prefetch = 0 : i64, scratch_operands = 0 : i64, tpu.core_type = #tpu.core_type<tc>, window_params = [{transform_indices = @transform_0, window_bounds = array<i64: 8, 512>}, {transform_indices = @transform_1, window_bounds = array<i64: 8, 512>}, {transform_indices = @transform_2, window_bounds = array<i64: 8, 512>}, {pipeline_mode = #tpu.pipeline_mode<synchronous>, transform_indices = @transform_3, window_bounds = array<i64: 8, 512>}, {pipeline_mode = #tpu.pipeline_mode<synchronous>, transform_indices = @transform_4, window_bounds = array<i64: 8, 512>}]} {
    %c0_i32 = arith.constant 0 : i32
    %0 = arith.cmpi eq, %arg0, %c0_i32 : i32
    %1 = arith.extui %0 : i1 to i32
    %c0_i32_0 = arith.constant 0 : i32
    %2 = arith.cmpi ne, %1, %c0_i32_0 : i32
    scf.if %2 {
      %cst_15 = arith.constant 0.000000e+00 : f32
      %19 = vector.broadcast %cst_15 : f32 to vector<8x512xf32>
      %c0_16 = arith.constant 0 : index
      %c0_17 = arith.constant 0 : index
      %20 = vector.load %arg4[%c0_16, %c0_17] : memref<8x512xf32, #tpu.memory_space<vmem>>, vector<8x512xf32>
      tpu.vector_store %arg4[%c0_16, %c0_17], %19 {strides = array<i32>} : memref<8x512xf32, #tpu.memory_space<vmem>>, vector<8x512xf32>,
      %cst_18 = arith.constant 0.000000e+00 : f32
      %21 = vector.broadcast %cst_18 : f32 to vector<8x512xf32>
      %c0_19 = arith.constant 0 : index
      %c0_20 = arith.constant 0 : index
      %22 = vector.load %arg5[%c0_19, %c0_20] : memref<8x512xf32, #tpu.memory_space<vmem>>, vector<8x512xf32>
      tpu.vector_store %arg5[%c0_19, %c0_20], %21 {strides = array<i32>} : memref<8x512xf32, #tpu.memory_space<vmem>>, vector<8x512xf32>,
    } else {
    }
    %c0 = arith.constant 0 : index
    %c0_1 = arith.constant 0 : index
    %3 = vector.load %arg1[%c0, %c0_1] : memref<8x512xf32, #tpu.memory_space<vmem>>, vector<8x512xf32>
    %c0_2 = arith.constant 0 : index
    %c0_3 = arith.constant 0 : index
    %4 = vector.load %arg2[%c0_2, %c0_3] : memref<8x512xf32, #tpu.memory_space<vmem>>, vector<8x512xf32>
    %c0_4 = arith.constant 0 : index
    %c0_5 = arith.constant 0 : index
    %5 = vector.load %arg3[%c0_4, %c0_5] : memref<8x512xf32, #tpu.memory_space<vmem>>, vector<8x512xf32>
    %6 = arith.subf %3, %5 : vector<8x512xf32>
    %7 = arith.mulf %6, %4 : vector<8x512xf32>
    %8 = math.absf %7 : vector<8x512xf32>
    %c0_6 = arith.constant 0 : index
    %c0_7 = arith.constant 0 : index
    %9 = vector.load %arg4[%c0_6, %c0_7] : memref<8x512xf32, #tpu.memory_space<vmem>>, vector<8x512xf32>
    %10 = vector.shape_cast %8 : vector<8x512xf32> to vector<1x8x512xf32>
    %cst = arith.constant dense<0.000000e+00> : vector<8x512xf32>
    %11 = vector.multi_reduction <add>, %10, %cst [0] : vector<1x8x512xf32> to vector<8x512xf32>
    %12 = arith.addf %9, %11 : vector<8x512xf32>
    %c0_8 = arith.constant 0 : index
    %c0_9 = arith.constant 0 : index
    %13 = vector.load %arg4[%c0_8, %c0_9] : memref<8x512xf32, #tpu.memory_space<vmem>>, vector<8x512xf32>
    tpu.vector_store %arg4[%c0_8, %c0_9], %12 {strides = array<i32>} : memref<8x512xf32, #tpu.memory_space<vmem>>, vector<8x512xf32>,
    %c0_10 = arith.constant 0 : index
    %c0_11 = arith.constant 0 : index
    %14 = vector.load %arg5[%c0_10, %c0_11] : memref<8x512xf32, #tpu.memory_space<vmem>>, vector<8x512xf32>
    %15 = vector.shape_cast %4 : vector<8x512xf32> to vector<1x8x512xf32>
    %cst_12 = arith.constant dense<0.000000e+00> : vector<8x512xf32>
    %16 = vector.multi_reduction <add>, %15, %cst_12 [0] : vector<1x8x512xf32> to vector<8x512xf32>
    %17 = arith.addf %14, %16 : vector<8x512xf32>
    %c0_13 = arith.constant 0 : index
    %c0_14 = arith.constant 0 : index
    %18 = vector.load %arg5[%c0_13, %c0_14] : memref<8x512xf32, #tpu.memory_space<vmem>>, vector<8x512xf32>
    tpu.vector_store %arg5[%c0_13, %c0_14], %17 {strides = array<i32>} : memref<8x512xf32, #tpu.memory_space<vmem>>, vector<8x512xf32>,
    return
  }
  func.func @transform_0(%arg0: i32) -> (i32, i32) {
    %c0_i32 = arith.constant 0 : i32
    %c0_i32_0 = arith.constant 0 : i32
    return %arg0, %c0_i32 : i32, i32
  }
  func.func @transform_1(%arg0: i32) -> (i32, i32) {
    %c0_i32 = arith.constant 0 : i32
    %c0_i32_0 = arith.constant 0 : i32
    return %arg0, %c0_i32 : i32, i32
  }
  func.func @transform_2(%arg0: i32) -> (i32, i32) {
    %c0_i32 = arith.constant 0 : i32
    %c0_i32_0 = arith.constant 0 : i32
    return %arg0, %c0_i32 : i32, i32
  }
  func.func @transform_3(%arg0: i32) -> (i32, i32) {
    %c0_i32 = arith.constant 0 : i32
    %c0_i32_0 = arith.constant 0 : i32
    %c0_i32_1 = arith.constant 0 : i32
    return %c0_i32, %c0_i32_0 : i32, i32
  }
  func.func @transform_4(%arg0: i32) -> (i32, i32) {
    %c0_i32 = arith.constant 0 : i32
    %c0_i32_0 = arith.constant 0 : i32
    %c0_i32_1 = arith.constant 0 : i32
    return %c0_i32, %c0_i32_0 : i32, i32
  }
}

</mosaic_0001>

<llo_original>
// kernel: tpu_custom_call.1
$region0: #{tpu_custom_call.1}
  #allocation0 [shape = 'u32[]', space=smem, size = 0x4, offset = 0x4, fixed_abs, tag = 'smem constant byte address 0x4 - core index']
  #allocation1 [shape = 'u32[144,128]{1,0:T(1,128)}', space=vmem, size = 0x12000, scoped, tag = 'internal scratch']
  %s0 = inlined_call_operand.hbm [shape: f32[8,512], index: 0, kind: input, shape index: {}]
  %s1 = inlined_call_operand.hbm [shape: f32[8,512], index: 1, kind: input, shape index: {}]
  %s2 = inlined_call_operand.hbm [shape: f32[8,512], index: 2, kind: input, shape index: {}]
  %s3 = inlined_call_operand.hbm [shape: f32[8,512], index: 3, kind: output, shape index: {0}]
  %s4 = inlined_call_operand.hbm [shape: f32[8,512], index: 4, kind: output, shape index: {1}]
  %5 = xla_tuple %s3, %s4
  %s6 = sld [smem:[#allocation0]]
  $region46: #{tpu_custom_call.1} parent=0
    _
  %s8 = ssub.s32 1, %s6
  %s9 = scalar_select 0, %s8, %s6
  $region1: #{tpu_custom_call.1} parent=0
    #allocation2 [shape = 'u8[16384]{0}', space=vmem, size = 0x4000, scoped, tag = 'input window, operand 0, single buffered']
    #allocation3 [shape = 's32[1]{0}', space=sflag, size = 0x4, scoped, tag = 'scoped memory for tpu_custom_call.1']
    #allocation4 [shape = 's32[1]{0}', space=sflag, size = 0x4, scoped, tag = 'scoped memory for tpu_custom_call.1']
    #allocation5 [shape = 'u8[16384]{0}', space=vmem, size = 0x4000, scoped, tag = 'input window, operand 1, single buffered']
    #allocation6 [shape = 's32[1]{0}', space=sflag, size = 0x4, scoped, tag = 'scoped memory for tpu_custom_call.1']
    #allocation7 [shape = 'u8[16384]{0}', space=vmem, size = 0x4000, scoped, tag = 'input window, operand 2, single buffered']
    #allocation8 [shape = 'u8[16384]{0}', space=vmem, size = 0x4000, scoped, tag = 'output window, operand 0, single buffered']
    #allocation9 [shape = 'u8[16384]{0}', space=vmem, size = 0x4000, scoped, tag = 'output window, operand 1, single buffered']
    #allocation10 [shape = 's32[1]{0}', space=sflag, size = 0x4, scoped, tag = 'scoped memory for tpu_custom_call.1']
    %10 = vsyncpa [#allocation3], 0
    %11 = vsyncpa [#allocation6], 0
    %12 = vsyncpa [#allocation4], 0
    %13 = vsyncpa [#allocation10], 0
    // Predicated region
    $region2: #{tpu_custom_call.1} parent=1 // pred_check
      _
    $region3: #{tpu_custom_call.1} parent=1 // pred_check_branch
      %15 = sbr.rel (0) target = $region5
    $region4: #{tpu_custom_call.1} parent=1 // pred_region
      %s17 = ssub.s32 512, 512
      %18 = vsyncadd [#allocation3], %s17
      %s20 = sshll.u32 [#allocation2], 4
      %s21 = int_to_ptr.vmem [resolvable:$true] %s20
      %23 = dma.hbm_to_vmem [thread:$0]  %s0, 512, %s21, [#allocation3]
    $region5: #{tpu_custom_call.1} parent=1 // pred_fallthru
      _
    // Predicated region
    $region6: #{tpu_custom_call.1} parent=1 // pred_check
      _
    $region7: #{tpu_custom_call.1} parent=1 // pred_check_branch
      %25 = sbr.rel (0) target = $region9
    $region8: #{tpu_custom_call.1} parent=1 // pred_region
      %s27 = ssub.s32 512, 512
      %28 = vsyncadd [#allocation6], %s27
      %s30 = sshll.u32 [#allocation5], 4
      %s31 = int_to_ptr.vmem [resolvable:$true] %s30
      %33 = dma.hbm_to_vmem [thread:$0]  %s1, 512, %s31, [#allocation6]
    $region9: #{tpu_custom_call.1} parent=1 // pred_fallthru
      _
    // Predicated region
    $region10: #{tpu_custom_call.1} parent=1 // pred_check
      _
    $region11: #{tpu_custom_call.1} parent=1 // pred_check_branch
      %35 = sbr.rel (0) target = $region13
    $region12: #{tpu_custom_call.1} parent=1 // pred_region
      %s37 = ssub.s32 512, 512
      %38 = vsyncadd [#allocation6], %s37
      %s40 = sshll.u32 [#allocation7], 4
      %s41 = int_to_ptr.vmem [resolvable:$true] %s40
      %43 = dma.hbm_to_vmem [thread:$0]  %s2, 512, %s41, [#allocation6]
    $region13: #{tpu_custom_call.1} parent=1 // pred_fallthru
      _
    // Predicated region
    $region14: #{tpu_custom_call.1} parent=1 // pred_check
      _
    $region15: #{tpu_custom_call.1} parent=1 // pred_check_branch
      %45 = sbr.rel (0) target = $region17
    $region16: #{tpu_custom_call.1} parent=1 // pred_region
      %46 = dma.done [#allocation3], 512
    $region17: #{tpu_custom_call.1} parent=1 // pred_fallthru
      _
    // Predicated region
    $region18: #{tpu_custom_call.1} parent=1 // pred_check
      _
    $region19: #{tpu_custom_call.1} parent=1 // pred_check_branch
      %48 = sbr.rel (0) target = $region21
    $region20: #{tpu_custom_call.1} parent=1 // pred_region
      %49 = dma.done [#allocation6], 512
    $region21: #{tpu_custom_call.1} parent=1 // pred_fallthru
      _
    // Predicated region
    $region22: #{tpu_custom_call.1} parent=1 // pred_check
      _
    $region23: #{tpu_custom_call.1} parent=1 // pred_check_branch
      %51 = sbr.rel (0) target = $region25
    $region24: #{tpu_custom_call.1} parent=1 // pred_region
      %52 = dma.done [#allocation6], 512
    $region25: #{tpu_custom_call.1} parent=1 // pred_fallthru
      _
    %p53 = scmp.eq.s32.totalorder 0, 0
    // Predicated region
    $region26: #{tpu_custom_call.1} parent=1 // pred_check
      %p54 = pneg %p53
    $region27: #{tpu_custom_call.1} parent=1 // pred_check_branch
      %56 = sbr.rel (%p54) target = $region29
    $region28: #{tpu_custom_call.1} parent=1 // pred_region
      %57 = vst [vmem:[#allocation8] sm:$0xff] 0.0
      %58 = vst [vmem:[#allocation8 + $0x8] sm:$0xff] 0.0
      %59 = vst [vmem:[#allocation8 + $0x10] sm:$0xff] 0.0
      %60 = vst [vmem:[#allocation8 + $0x18] sm:$0xff] 0.0
      %61 = vst [vmem:[#allocation9] sm:$0xff] 0.0
      %62 = vst [vmem:[#allocation9 + $0x8] sm:$0xff] 0.0
      %63 = vst [vmem:[#allocation9 + $0x10] sm:$0xff] 0.0
      %64 = vst [vmem:[#allocation9 + $0x18] sm:$0xff] 0.0
    $region29: #{tpu_custom_call.1} parent=1 // pred_fallthru
      _
    %v65 = vld [vmem:[#allocation2] sm:$0xff]
    %v66 = vld [vmem:[#allocation2 + $0x8] sm:$0xff]
    %v67 = vld [vmem:[#allocation2 + $0x10] sm:$0xff]
    %v68 = vld [vmem:[#allocation2 + $0x18] sm:$0xff]
    %v69 = vld [vmem:[#allocation5] sm:$0xff]
    %v70 = vld [vmem:[#allocation5 + $0x8] sm:$0xff]
    %v71 = vld [vmem:[#allocation5 + $0x10] sm:$0xff]
    %v72 = vld [vmem:[#allocation5 + $0x18] sm:$0xff]
    %v73 = vld [vmem:[#allocation7] sm:$0xff]
    %v74 = vld [vmem:[#allocation7 + $0x8] sm:$0xff]
    %v75 = vld [vmem:[#allocation7 + $0x10] sm:$0xff]
    %v76 = vld [vmem:[#allocation7 + $0x18] sm:$0xff]
    %v77 = vsub.f32 %v65, %v73
    %v78 = vsub.f32 %v66, %v74
    %v79 = vsub.f32 %v67, %v75
    %v80 = vsub.f32 %v68, %v76
    %v81 = vmul.f32 %v77, %v69
    %v82 = vmul.f32 %v78, %v70
    %v83 = vmul.f32 %v79, %v71
    %v84 = vmul.f32 %v80, %v72
    %v85 = vand.u32 2147483647, %v81
    %v86 = vand.u32 2147483647, %v82
    %v87 = vand.u32 2147483647, %v83
    %v88 = vand.u32 2147483647, %v84
    %v89 = vld [vmem:[#allocation8] sm:$0xff]
    %v90 = vld [vmem:[#allocation8 + $0x8] sm:$0xff]
    %v91 = vld [vmem:[#allocation8 + $0x10] sm:$0xff]
    %v92 = vld [vmem:[#allocation8 + $0x18] sm:$0xff]
    %v93 = vadd.f32 %v85, 0.0
    %v94 = vadd.f32 %v86, 0.0
    %v95 = vadd.f32 %v87, 0.0
    %v96 = vadd.f32 %v88, 0.0
    %v97 = vadd.f32 %v89, %v93
    %v98 = vadd.f32 %v90, %v94
    %v99 = vadd.f32 %v91, %v95
    %v100 = vadd.f32 %v92, %v96
    %101 = vst [vmem:[#allocation8] sm:$0xff] %v97
    %102 = vst [vmem:[#allocation8 + $0x8] sm:$0xff] %v98
    %103 = vst [vmem:[#allocation8 + $0x10] sm:$0xff] %v99
    %104 = vst [vmem:[#allocation8 + $0x18] sm:$0xff] %v100
    %v105 = vld [vmem:[#allocation9] sm:$0xff]
    %v106 = vld [vmem:[#allocation9 + $0x8] sm:$0xff]
    %v107 = vld [vmem:[#allocation9 + $0x10] sm:$0xff]
    %v108 = vld [vmem:[#allocation9 + $0x18] sm:$0xff]
    %v109 = vadd.f32 %v69, 0.0
    %v110 = vadd.f32 %v70, 0.0
    %v111 = vadd.f32 %v71, 0.0
    %v112 = vadd.f32 %v72, 0.0
    %v113 = vadd.f32 %v105, %v109
    %v114 = vadd.f32 %v106, %v110
    %v115 = vadd.f32 %v107, %v111
    %v116 = vadd.f32 %v108, %v112
    %117 = vst [vmem:[#allocation9] sm:$0xff] %v113
    %118 = vst [vmem:[#allocation9 + $0x8] sm:$0xff] %v114
    %119 = vst [vmem:[#allocation9 + $0x10] sm:$0xff] %v115
    %120 = vst [vmem:[#allocation9 + $0x18] sm:$0xff] %v116
    // Predicated region
    $region30: #{tpu_custom_call.1} parent=1 // pred_check
      _
    $region31: #{tpu_custom_call.1} parent=1 // pred_check_branch
      %122 = sbr.rel (0) target = $region33
    $region32: #{tpu_custom_call.1} parent=1 // pred_region
      %s124 = ssub.s32 512, 512
      %125 = vsyncadd [#allocation4], %s124
      %s127 = sshll.u32 [#allocation8], 4
      %s128 = int_to_ptr.vmem [resolvable:$true] %s127
      %130 = dma.vmem_to_hbm [thread:$0]  %s128, 512, %s3, [#allocation4]
    $region33: #{tpu_custom_call.1} parent=1 // pred_fallthru
      _
    // Predicated region
    $region34: #{tpu_custom_call.1} parent=1 // pred_check
      _
    $region35: #{tpu_custom_call.1} parent=1 // pred_check_branch
      %132 = sbr.rel (0) target = $region37
    $region36: #{tpu_custom_call.1} parent=1 // pred_region
      %s134 = ssub.s32 512, 512
      %135 = vsyncadd [#allocation10], %s134
      %s137 = sshll.u32 [#allocation9], 4
      %s138 = int_to_ptr.vmem [resolvable:$true] %s137
      %140 = dma.vmem_to_hbm [thread:$0]  %s138, 512, %s4, [#allocation10]
    $region37: #{tpu_custom_call.1} parent=1 // pred_fallthru
      _
    // Predicated region
    $region38: #{tpu_custom_call.1} parent=1 // pred_check
      _
    $region39: #{tpu_custom_call.1} parent=1 // pred_check_branch
      %142 = sbr.rel (0) target = $region41
    $region40: #{tpu_custom_call.1} parent=1 // pred_region
      %143 = dma.done [#allocation4], 512
    $region41: #{tpu_custom_call.1} parent=1 // pred_fallthru
      _
    // Predicated region
    $region42: #{tpu_custom_call.1} parent=1 // pred_check
      _
    $region43: #{tpu_custom_call.1} parent=1 // pred_check_branch
      %145 = sbr.rel (0) target = $region45
    $region44: #{tpu_custom_call.1} parent=1 // pred_region
      %146 = dma.done [#allocation10], 512
    $region45: #{tpu_custom_call.1} parent=1 // pred_fallthru
      _
    %147 = vsyncpa [#allocation3], 1
    %148 = vsyncpa [#allocation6], 1
    %149 = vsyncpa [#allocation4], 1
    %150 = vsyncpa [#allocation10], 1

</llo_original>
